<compile_context>
chip_gen: v7x
topology: tpu7x:2x2x1
jax: 0.10.0
libtpu: 0.0.40
codegen_flags: <defaults>
</compile_context>

<pallas_src>
import functools

import jax
import jax.numpy as jnp
from jax.experimental import pallas as pl
from jax.experimental.pallas import tpu as pltpu


def _round_up(n: int, m: int) -> int:
    return ((n + m - 1) // m) * m


def mlp_kernel(x_ref, w1_ref, b1_ref, w2_ref, b2_ref, o_ref):
    # fc1: (TB, D) @ (D, H) -> f32 accumulate on the MXU.
    h = jnp.dot(x_ref[...], w1_ref[...], preferred_element_type=jnp.float32)
    # Bias add + ReLU at f32 vreg width (VPU).
    h = jnp.maximum(h + b1_ref[...].astype(jnp.float32), 0.0)
    # fc2: (TB, H) @ (H, N) -> f32 accumulate.  Everything stays f32 so the
    # numerics match the PyTorch reference exactly.
    out = jnp.dot(h, w2_ref[...].astype(jnp.float32),
                  preferred_element_type=jnp.float32)
    out = out + b2_ref[...].astype(jnp.float32)
    o_ref[...] = out.astype(o_ref.dtype)


def _pick_block_rows(B, D, H, N, x_itemsize, out_itemsize,
                     block_rows, vmem_budget):
    """VMEM- and D-aware row-tile selection (TB), multiple of 8."""
    # VMEM physically pads the lane (last) dim of each buffer to 128.
    d_pad = _round_up(D, 128)
    h_pad = _round_up(H, 128)
    n_pad = _round_up(N, 128)
    # Per-row bytes: x double buffer + out double buffer + f32 intermediates
    # (h / relu(h) / out).  Weights are tiny and ignored.
    bytes_per_row = (2 * d_pad * x_itemsize
                     + 2 * n_pad * out_itemsize
                     + 4 * (2 * h_pad + 2 * n_pad))
    tb_cap = max(8, (vmem_budget // bytes_per_row) // 8 * 8)

    tb = max(8, min(block_rows, tb_cap, _round_up(B, 8)))
    tb = _round_up(tb, 8)
    # Keep >= 2 grid steps for non-trivial batches so the "parallel" batch
    # axis can shard across v7x's two TensorCores.
    if B > 16 and pl.cdiv(B, tb) < 2:
        tb = max(8, _round_up(pl.cdiv(B, 2), 8))
    return tb
    # Note: for latency runs with tiny TB (<=512) a pl.Buffered(3)
    # pipeline_mode on the x BlockSpec would hide the exposed DMA latency;
    # at the default TB the 2-deep pipeline is sufficient.


@functools.partial(jax.jit, static_argnames=("block_rows", "out_dtype"))
def dnn_forward(x, w1, b1, w2, b2, *, block_rows: int = 8192, out_dtype=None):
    """Pallas-TPU forward of DNN.

    x:  (B, input_n)
    w1: (input_n, 50), b1: (50,)
    w2: (50, 3),       b2: (3,)
    returns (B, 3) in out_dtype (default: x.dtype)
    """
    B, D = x.shape
    H = w1.shape[1]
    N = w2.shape[1]
    out_dtype = jnp.dtype(x.dtype) if out_dtype is None else jnp.dtype(out_dtype)

    # Tiny per-call reshapes only (no padding of weights/biases needed).
    b1_2d = b1.reshape(1, H)
    b2_2d = b2.reshape(1, N)

    # Generation-aware VMEM budget (leave headroom for compiler temporaries).
    try:
        phys_vmem = int(pltpu.get_tpu_info().vmem_capacity_bytes)
    except Exception:
        phys_vmem = 64 << 20  # conservative (v7x per-TC physical VMEM)
    vmem_budget = min(24 << 20, (phys_vmem * 3) // 8)

    TB = _pick_block_rows(B, D, H, N,
                          jnp.dtype(x.dtype).itemsize,
                          out_dtype.itemsize,
                          block_rows, vmem_budget)
    # Ragged last block is fine: Pallas masks OOB reads and drops OOB writes.
    grid = (pl.cdiv(B, TB),)

    out = pl.pallas_call(
        mlp_kernel,
        out_shape=jax.ShapeDtypeStruct((B, N), out_dtype),
        grid=grid,
        in_specs=[
            # x tile streams over the batch grid (double-buffered by Pallas).
            pl.BlockSpec((TB, D), lambda i: (i, 0)),
            # Weights / biases: constant index_map -> resident across all steps.
            pl.BlockSpec((D, H), lambda i: (0, 0)),
            pl.BlockSpec((1, H), lambda i: (0, 0)),
            pl.BlockSpec((H, N), lambda i: (0, 0)),
            pl.BlockSpec((1, N), lambda i: (0, 0)),
        ],
        out_specs=pl.BlockSpec((TB, N), lambda i: (i, 0)),
        compiler_params=pltpu.CompilerParams(
            dimension_semantics=("parallel",),
            # Explicitly raise the scoped VMEM limit so the large TB also
            # lowers on v5e (16 MiB default scoped limit).
            vmem_limit_bytes=vmem_budget + (12 << 20),
        ),
    )(x, w1, b1_2d, w2, b2_2d)

    return out


def init_params(key, input_n, hidden=50, out_n=3, dtype=jnp.float32):
    """Mimics PyTorch nn.Linear default init (uniform +-1/sqrt(fan_in))."""
    k1, k2, k3, k4 = jax.random.split(key, 4)
    bound1 = 1.0 / jnp.sqrt(input_n)
    bound2 = 1.0 / jnp.sqrt(hidden)
    w1 = jax.random.uniform(k1, (input_n, hidden), dtype, -bound1, bound1)
    b1 = jax.random.uniform(k2, (hidden,), dtype, -bound1, bound1)
    w2 = jax.random.uniform(k3, (hidden, out_n), dtype, -bound2, bound2)
    b2 = jax.random.uniform(k4, (out_n,), dtype, -bound2, bound2)
    return w1, b1, w2, b2


def _reference(x, w1, b1, w2, b2):
    return jnp.maximum(x @ w1 + b1, 0.0) @ w2 + b2


if __name__ == "__main__":
    key = jax.random.PRNGKey(0)
    kx1, kx2, kp = jax.random.split(key, 3)

    input_n = 32
    w1, b1, w2, b2 = init_params(kp, input_n)

    # --- small-batch correctness test (single grid step) ---------------------
    x_small = jax.random.normal(kx1, (8, input_n), dtype=jnp.float32)
    out_small = jax.block_until_ready(dnn_forward(x_small, w1, b1, w2, b2))
    ref_small = _reference(x_small, w1, b1, w2, b2)
    assert out_small.shape == (8, 3)
    assert jnp.allclose(out_small, ref_small, atol=1e-5, rtol=1e-5)

    # --- ragged multi-step grid: 300 rows, TB=128 -> grid=(3,), partial last -
    x_big = jax.random.normal(kx2, (300, input_n), dtype=jnp.float32)
    out_big = jax.block_until_ready(
        dnn_forward(x_big, w1, b1, w2, b2, block_rows=128))
    ref_big = _reference(x_big, w1, b1, w2, b2)
    assert out_big.shape == (300, 3)
    assert jnp.allclose(out_big, ref_big, atol=1e-5, rtol=1e-5)

    # --- default (VMEM-aware) tiling: exercises the 2-step megacore split ----
    out_def = jax.block_until_ready(dnn_forward(x_big, w1, b1, w2, b2))
    assert out_def.shape == (300, 3)
    assert jnp.allclose(out_def, ref_big, atol=1e-5, rtol=1e-5)

    print("KERNEL_OK")
</pallas_src>

<mosaic_0001>
module attributes {stable_mosaic.version = 11 : i64} {
  func.func @mlp_kernel(%arg0: i32, %arg1: memref<8x32xf32, #tpu.memory_space<vmem>>, %arg2: memref<32x50xf32, #tpu.memory_space<vmem>>, %arg3: memref<1x50xf32, #tpu.memory_space<vmem>>, %arg4: memref<50x3xf32, #tpu.memory_space<vmem>>, %arg5: memref<1x3xf32, #tpu.memory_space<vmem>>, %arg6: memref<8x3xf32, #tpu.memory_space<vmem>>) attributes {dimension_semantics = [#tpu.dimension_semantics<parallel>], iteration_bounds = array<i64: 1>, scalar_prefetch = 0 : i64, scratch_operands = 0 : i64, tpu.core_type = #tpu.core_type<tc>, window_params = [{transform_indices = @transform_0, window_bounds = array<i64: 8, 32>}, {pipeline_mode = #tpu.pipeline_mode<synchronous>, transform_indices = @transform_1, window_bounds = array<i64: 32, 50>}, {pipeline_mode = #tpu.pipeline_mode<synchronous>, transform_indices = @transform_2, window_bounds = array<i64: 1, 50>}, {pipeline_mode = #tpu.pipeline_mode<synchronous>, transform_indices = @transform_3, window_bounds = array<i64: 50, 3>}, {pipeline_mode = #tpu.pipeline_mode<synchronous>, transform_indices = @transform_4, window_bounds = array<i64: 1, 3>}, {transform_indices = @transform_5, window_bounds = array<i64: 8, 3>}]} {
    %c0 = arith.constant 0 : index
    %c0_0 = arith.constant 0 : index
    %0 = vector.load %arg1[%c0, %c0_0] : memref<8x32xf32, #tpu.memory_space<vmem>>, vector<8x32xf32>
    %c0_1 = arith.constant 0 : index
    %c0_2 = arith.constant 0 : index
    %1 = vector.load %arg2[%c0_1, %c0_2] : memref<32x50xf32, #tpu.memory_space<vmem>>, vector<32x50xf32>
    %cst = arith.constant dense<0.000000e+00> : vector<8x50xf32>
    %2 = tpu.matmul %0, %1, %cst {dimension_numbers = #tpu.dot_dimension_numbers<[1], [0], [0], [1], [0, 0, 1, 1], [], []>} : vector<8x32xf32>, vector<32x50xf32>, vector<8x50xf32> -> vector<8x50xf32>
    %c0_3 = arith.constant 0 : index
    %c0_4 = arith.constant 0 : index
    %3 = vector.load %arg3[%c0_3, %c0_4] : memref<1x50xf32, #tpu.memory_space<vmem>>, vector<1x50xf32>
    %4 = vector.broadcast %3 : vector<1x50xf32> to vector<8x50xf32>
    %5 = arith.addf %2, %4 : vector<8x50xf32>
    %cst_5 = arith.constant 0.000000e+00 : f32
    %6 = vector.broadcast %cst_5 : f32 to vector<8x50xf32>
    %7 = arith.maximumf %5, %6 : vector<8x50xf32>
    %c0_6 = arith.constant 0 : index
    %c0_7 = arith.constant 0 : index
    %8 = vector.load %arg4[%c0_6, %c0_7] : memref<50x3xf32, #tpu.memory_space<vmem>>, vector<50x3xf32>
    %cst_8 = arith.constant dense<0.000000e+00> : vector<8x3xf32>
    %9 = tpu.matmul %7, %8, %cst_8 {dimension_numbers = #tpu.dot_dimension_numbers<[1], [0], [0], [1], [0, 0, 1, 1], [], []>} : vector<8x50xf32>, vector<50x3xf32>, vector<8x3xf32> -> vector<8x3xf32>
    %c0_9 = arith.constant 0 : index
    %c0_10 = arith.constant 0 : index
    %10 = vector.load %arg5[%c0_9, %c0_10] : memref<1x3xf32, #tpu.memory_space<vmem>>, vector<1x3xf32>
    %11 = vector.broadcast %10 : vector<1x3xf32> to vector<8x3xf32>
    %12 = arith.addf %9, %11 : vector<8x3xf32>
    %c0_11 = arith.constant 0 : index
    %c0_12 = arith.constant 0 : index
    %13 = vector.load %arg6[%c0_11, %c0_12] : memref<8x3xf32, #tpu.memory_space<vmem>>, vector<8x3xf32>
    tpu.vector_store %arg6[%c0_11, %c0_12], %12 {strides = array<i32>} : memref<8x3xf32, #tpu.memory_space<vmem>>, vector<8x3xf32>,
    return
  }
  func.func @transform_0(%arg0: i32) -> (i32, i32) {
    %c0_i32 = arith.constant 0 : i32
    %c0_i32_0 = arith.constant 0 : i32
    return %arg0, %c0_i32 : i32, i32
  }
  func.func @transform_1(%arg0: i32) -> (i32, i32) {
    %c0_i32 = arith.constant 0 : i32
    %c0_i32_0 = arith.constant 0 : i32
    %c0_i32_1 = arith.constant 0 : i32
    return %c0_i32, %c0_i32_0 : i32, i32
  }
  func.func @transform_2(%arg0: i32) -> (i32, i32) {
    %c0_i32 = arith.constant 0 : i32
    %c0_i32_0 = arith.constant 0 : i32
    %c0_i32_1 = arith.constant 0 : i32
    return %c0_i32, %c0_i32_0 : i32, i32
  }
  func.func @transform_3(%arg0: i32) -> (i32, i32) {
    %c0_i32 = arith.constant 0 : i32
    %c0_i32_0 = arith.constant 0 : i32
    %c0_i32_1 = arith.constant 0 : i32
    return %c0_i32, %c0_i32_0 : i32, i32
  }
  func.func @transform_4(%arg0: i32) -> (i32, i32) {
    %c0_i32 = arith.constant 0 : i32
    %c0_i32_0 = arith.constant 0 : i32
    %c0_i32_1 = arith.constant 0 : i32
    return %c0_i32, %c0_i32_0 : i32, i32
  }
  func.func @transform_5(%arg0: i32) -> (i32, i32) {
    %c0_i32 = arith.constant 0 : i32
    %c0_i32_0 = arith.constant 0 : i32
    return %arg0, %c0_i32 : i32, i32
  }
}

</mosaic_0001>

<llo_original>
// kernel: dnn_forward.1
$region0: #{dnn_forward.1}
  #allocation0 [shape = 'u32[]', space=smem, size = 0x4, offset = 0x4, fixed_abs, tag = 'smem constant byte address 0x4 - core index']
  #allocation1 [shape = 'u32[144,128]{1,0:T(1,128)}', space=vmem, size = 0x12000, scoped, tag = 'internal scratch']
  %s0 = inlined_call_operand.vmem [shape: f32[8,32], index: 0, kind: input, shape index: {}]
  %s1 = inlined_call_operand.vmem [shape: f32[32,50], index: 1, kind: input, shape index: {}]
  %s2 = inlined_call_operand.vmem [shape: f32[1,50], index: 2, kind: input, shape index: {}]
  %s3 = inlined_call_operand.vmem [shape: f32[50,3], index: 3, kind: input, shape index: {}]
  %s4 = inlined_call_operand.vmem [shape: f32[1,3], index: 4, kind: input, shape index: {}]
  %s5 = inlined_call_operand.vmem [shape: f32[8,3], index: 5, kind: output, shape index: {}]
  %s6 = sld [smem:[#allocation0]]
  $region30: #{dnn_forward.1} parent=0
    _
  %s8 = ssub.s32 1, %s6
  %s9 = scalar_select 0, %s8, %s6
  // Predicated region
  $region2: #{dnn_forward.1} parent=0 // pred_check
    _
  $region3: #{dnn_forward.1} parent=0 // pred_check_branch
    %11 = sbr.rel (0) target = $region5
  $region4: #{dnn_forward.1} parent=0 // pred_region
    _
  $region5: #{dnn_forward.1} parent=0 // pred_fallthru
    _
  // Predicated region
  $region6: #{dnn_forward.1} parent=0 // pred_check
    _
  $region7: #{dnn_forward.1} parent=0 // pred_check_branch
    %13 = sbr.rel (0) target = $region9
  $region8: #{dnn_forward.1} parent=0 // pred_region
    _
  $region9: #{dnn_forward.1} parent=0 // pred_fallthru
    _
  // Predicated region
  $region10: #{dnn_forward.1} parent=0 // pred_check
    _
  $region11: #{dnn_forward.1} parent=0 // pred_check_branch
    %15 = sbr.rel (0) target = $region13
  $region12: #{dnn_forward.1} parent=0 // pred_region
    _
  $region13: #{dnn_forward.1} parent=0 // pred_fallthru
    _
  // Predicated region
  $region14: #{dnn_forward.1} parent=0 // pred_check
    _
  $region15: #{dnn_forward.1} parent=0 // pred_check_branch
    %17 = sbr.rel (0) target = $region17
  $region16: #{dnn_forward.1} parent=0 // pred_region
    _
  $region17: #{dnn_forward.1} parent=0 // pred_fallthru
    _
  // Predicated region
  $region18: #{dnn_forward.1} parent=0 // pred_check
    _
  $region19: #{dnn_forward.1} parent=0 // pred_check_branch
    %19 = sbr.rel (0) target = $region21
  $region20: #{dnn_forward.1} parent=0 // pred_region
    _
  $region21: #{dnn_forward.1} parent=0 // pred_fallthru
    _
  %v20 = vld [vmem:[%s0] sm:$0xff]
  %v21 = vld [vmem:[%s1] sm:$0xff]
  %v22 = vld [vmem:[%s1 + $0x8] sm:$0xff]
  %v23 = vld [vmem:[%s1 + $0x10] sm:$0xff]
  %v24 = vld [vmem:[%s1 + $0x18] sm:$0xff]
  %v25 = vld [vmem:[%s2] sm:$0x1]
  %v27 = vlaneseq
  %v28 = vshrl.u32 %v27, 7
  %v29 = vsub.s32 0, %v28
  %v30 = vrot.slane %v25, %v29
  %vm32 = vcmask 261120
  %v34 = vsel %vm32, %v20, 0
  %36 = vmatprep.subr.mxu0 0.0
  %37 = vmatpush1.msra.mxu0 %v21
  %38 = vmatprep.subr.mxu0 0.0
  %39 = vmatpush1.msra.mxu0 %v22
  %40 = vmatprep.subr.mxu0 0.0
  %41 = vmatpush1.msra.mxu0 %v23
  %42 = vmatprep.subr.mxu0 0.0
  %43 = vmatpush1.msra.mxu0 %v24
  %44 = vmatprep.subr.mxu0 0.0
  %45 = vmatpush1.msra.mxu0 0.0
  %46 = vmatprep.subr.mxu0 0.0
  %47 = vmatpush1.msra.mxu0 0.0
  %48 = vmatprep.subr.mxu0 0.0
  %49 = vmatpush1.msra.mxu0 0.0
  %50 = vmatprep.subr.mxu0 0.0
  %51 = vmatpush1.msra.mxu0 0.0
  %52 = vmatprep.subr.mxu0 0.0
  %53 = vmatpush1.msra.mxu0 0.0
  %54 = vmatprep.subr.mxu0 0.0
  %55 = vmatpush1.msra.mxu0 0.0
  %56 = vmatprep.subr.mxu0 0.0
  %57 = vmatpush1.msra.mxu0 0.0
  %58 = vmatprep.subr.mxu0 0.0
  %59 = vmatpush1.msra.mxu0 0.0
  %60 = vmatprep.subr.mxu0 0.0
  %61 = vmatpush1.msra.mxu0 0.0
  %62 = vmatprep.subr.mxu0 0.0
  %63 = vmatpush1.msra.mxu0 0.0
  %64 = vmatprep.subr.mxu0 0.0
  %65 = vmatpush1.msra.mxu0 0.0
  %66 = vmatprep.subr.mxu0 0.0
  %67 = vmatpush1.msra.mxu0 0.0
  %68 = vmatprep.subr.mxu0 0.0
  %69 = vmatpush1.msra.mxu0 0.0
  %70 = vmatprep.subr.mxu0 0.0
  %71 = vmatpush1.msra.mxu0 0.0
  %72 = vmatprep.subr.mxu0 0.0
  %73 = vmatpush1.msra.mxu0 0.0
  %74 = vmatprep.subr.mxu0 0.0
  %75 = vmatpush1.msra.mxu0 0.0
  %76 = vmatprep.subr.mxu0 0.0
  %77 = vmatpush1.msra.mxu0 0.0
  %78 = vmatprep.subr.mxu0 0.0
  %79 = vmatpush1.msra.mxu0 0.0
  %80 = vmatprep.subr.mxu0 0.0
  %81 = vmatpush1.msra.mxu0 0.0
  %82 = vmatprep.subr.mxu0 0.0
  %83 = vmatpush1.msra.mxu0 0.0
  %84 = vmatprep.subr.mxu0 0.0
  %85 = vmatpush1.msra.mxu0 0.0
  %86 = vmatprep.subr.mxu0 0.0
  %87 = vmatpush1.msra.mxu0 0.0
  %88 = vmatprep.subr.mxu0 0.0
  %89 = vmatpush1.msra.mxu0 0.0
  %90 = vmatprep.subr.mxu0 0.0
  %91 = vmatpush1.msra.mxu0 0.0
  %92 = vmatprep.subr.mxu0 0.0
  %93 = vmatpush1.msra.mxu0 0.0
  %94 = vmatprep.subr.mxu0 0.0
  %95 = vmatpush1.msra.mxu0 0.0
  %96 = vmatprep.subr.mxu0 0.0
  %97 = vmatpush1.msra.mxu0 0.0
  %98 = vmatprep.subr.mxu0 0.0
  %99 = vmatpush1.msra.mxu0 0.0
  %100 = vmatprep.mubr.f32.mxu0 0.0
  %101 = vmatmul.mubr.f32.gmra.mrb[0].mxu0 %v34
  %v102 = vpop.f32.mrb[0].mxu0
  %v103 = vadd.f32 %v30, %v102
  %v104 = vpop.f32.mrb[0].mxu0
  %105 = vdwg.mxu0
  %v106 = vmax.f32 %v103, 0.0
  %v107 = vld [vmem:[%s3] sm:$0xff]
  %v108 = vld [vmem:[%s3 + $0x8] sm:$0xff]
  %v109 = vld [vmem:[%s3 + $0x10] sm:$0xff]
  %v110 = vld [vmem:[%s3 + $0x18] sm:$0xff]
  %v111 = vld [vmem:[%s3 + $0x20] sm:$0xff]
  %v112 = vld [vmem:[%s3 + $0x28] sm:$0xff]
  %v113 = vld [vmem:[%s3 + $0x30] sm:$0x3]
  %v114 = vld [vmem:[%s4] sm:$0x1]
  %v116 = vlaneseq
  %v117 = vshrl.u32 %v116, 7
  %v118 = vsub.s32 0, %v117
  %v119 = vrot.slane %v114, %v118
  %vm121 = vcmask 408576
  %v123 = vsel %vm121, %v106, 0
  %vm125 = vcmask 1041408
  %v127 = vsel %vm125, %v113, 0
  %129 = vmatprep.subr.mxu0 0.0
  %130 = vmatpush1.msra.mxu0 %v107
  %131 = vmatprep.subr.mxu0 0.0
  %132 = vmatpush1.msra.mxu0 %v108
  %133 = vmatprep.subr.mxu0 0.0
  %134 = vmatpush1.msra.mxu0 %v109
  %135 = vmatprep.subr.mxu0 0.0
  %136 = vmatpush1.msra.mxu0 %v110
  %137 = vmatprep.subr.mxu0 0.0
  %138 = vmatpush1.msra.mxu0 %v111
  %139 = vmatprep.subr.mxu0 0.0
  %140 = vmatpush1.msra.mxu0 %v112
  %141 = vmatprep.subr.mxu0 0.0
  %142 = vmatpush1.msra.mxu0 %v127
  %143 = vmatprep.subr.mxu0 0.0
  %144 = vmatpush1.msra.mxu0 0.0
  %145 = vmatprep.subr.mxu0 0.0
  %146 = vmatpush1.msra.mxu0 0.0
  %147 = vmatprep.subr.mxu0 0.0
  %148 = vmatpush1.msra.mxu0 0.0
  %149 = vmatprep.subr.mxu0 0.0
  %150 = vmatpush1.msra.mxu0 0.0
  %151 = vmatprep.subr.mxu0 0.0
  %152 = vmatpush1.msra.mxu0 0.0
  %153 = vmatprep.subr.mxu0 0.0
  %154 = vmatpush1.msra.mxu0 0.0
  %155 = vmatprep.subr.mxu0 0.0
  %156 = vmatpush1.msra.mxu0 0.0
  %157 = vmatprep.subr.mxu0 0.0
  %158 = vmatpush1.msra.mxu0 0.0
  %159 = vmatprep.subr.mxu0 0.0
  %160 = vmatpush1.msra.mxu0 0.0
  %161 = vmatprep.subr.mxu0 0.0
  %162 = vmatpush1.msra.mxu0 0.0
  %163 = vmatprep.subr.mxu0 0.0
  %164 = vmatpush1.msra.mxu0 0.0
  %165 = vmatprep.subr.mxu0 0.0
  %166 = vmatpush1.msra.mxu0 0.0
  %167 = vmatprep.subr.mxu0 0.0
  %168 = vmatpush1.msra.mxu0 0.0
  %169 = vmatprep.subr.mxu0 0.0
  %170 = vmatpush1.msra.mxu0 0.0
  %171 = vmatprep.subr.mxu0 0.0
  %172 = vmatpush1.msra.mxu0 0.0
  %173 = vmatprep.subr.mxu0 0.0
  %174 = vmatpush1.msra.mxu0 0.0
  %175 = vmatprep.subr.mxu0 0.0
  %176 = vmatpush1.msra.mxu0 0.0
  %177 = vmatprep.subr.mxu0 0.0
  %178 = vmatpush1.msra.mxu0 0.0
  %179 = vmatprep.subr.mxu0 0.0
  %180 = vmatpush1.msra.mxu0 0.0
  %181 = vmatprep.subr.mxu0 0.0
  %182 = vmatpush1.msra.mxu0 0.0
  %183 = vmatprep.subr.mxu0 0.0
  %184 = vmatpush1.msra.mxu0 0.0
  %185 = vmatprep.subr.mxu0 0.0
  %186 = vmatpush1.msra.mxu0 0.0
  %187 = vmatprep.subr.mxu0 0.0
  %188 = vmatpush1.msra.mxu0 0.0
  %189 = vmatprep.subr.mxu0 0.0
  %190 = vmatpush1.msra.mxu0 0.0
  %191 = vmatprep.subr.mxu0 0.0
  %192 = vmatpush1.msra.mxu0 0.0
  %193 = vmatprep.mubr.f32.mxu0 0.0
  %194 = vmatmul.mubr.f32.gmra.mrb[0].mxu0 %v123
  %v195 = vpop.f32.mrb[0].mxu0
  %v196 = vadd.f32 %v119, %v195
  %v197 = vpop.f32.mrb[0].mxu0
  %198 = vdwg.mxu0
  %vm199 = vcmask 23552
  %200 = vst.msk [vmem:[%s5] sm:$0xff] %vm199, %v196
  // Predicated region
  $region22: #{dnn_forward.1} parent=0 // pred_check
    _
  $region23: #{dnn_forward.1} parent=0 // pred_check_branch
    %202 = sbr.rel (0) target = $region25
  $region24: #{dnn_forward.1} parent=0 // pred_region
    _
  $region25: #{dnn_forward.1} parent=0 // pred_fallthru
    _
  // Predicated region
  $region26: #{dnn_forward.1} parent=0 // pred_check
    _
  $region27: #{dnn_forward.1} parent=0 // pred_check_branch
    %204 = sbr.rel (0) target = $region29
  $region28: #{dnn_forward.1} parent=0 // pred_region
    _
  $region29: #{dnn_forward.1} parent=0 // pred_fallthru
    _

</llo_original>
